<compile_context>
chip_gen: v5e
topology: v5e:2x2
jax: 0.10.0
libtpu: 0.0.40
codegen_flags: <defaults>
</compile_context>

<pallas_src>
import math

import jax
import jax.numpy as jnp
from jax.experimental import pallas as pl
from jax.experimental.pallas import tpu as pltpu


# ---------------------------------------------------------------------------
# Pallas blend kernel:  out = a * w_min + b * w_max   (elementwise, HBM-bound)
# ---------------------------------------------------------------------------

_LANE = 512                                  # multiple of 128 -> unmasked vector stores
_DEFAULT_MIN_PALLAS_BYTES = 2 * 1024 * 1024  # below this, the fused XLA FMA wins


def _round_up(x, m):
    return (x + m - 1) // m * m


def _cdiv(a, b):
    return -(-a // b)


def _tile_budget():
    """(per-operand tile bytes, vmem_limit_bytes), generation-aware."""
    try:
        vmem = getattr(pltpu.get_tpu_info(), "vmem_capacity_bytes", 64 * 1024 * 1024)
    except Exception:
        vmem = 64 * 1024 * 1024
    if vmem >= 96 * 1024 * 1024:
        # v5e / v6e: 128 MiB VMEM -> bigger tiles, fewer grid steps.
        return 8 * 1024 * 1024, 96 * 1024 * 1024
    # v7x: 64 MiB VMEM per TC -> 3 operands x 2 buffers x 4 MiB = 24 MiB working set.
    return 4 * 1024 * 1024, 48 * 1024 * 1024


def _blend_kernel(w_ref, a_ref, b_ref, o_ref):
    # w_ref is the (2,) f32 scalar-prefetch array in SMEM: one compile for all weights.
    w_min = w_ref[0]
    w_max = w_ref[1]
    # Compute in f32 (exact for f32 inputs; casts are free under the HBM roofline).
    a = a_ref[...].astype(jnp.float32)
    b = b_ref[...].astype(jnp.float32)
    o_ref[...] = (a * w_min + b * w_max).astype(o_ref.dtype)


def blend_pallas(a, b, w_min, w_max, *, min_bytes=_DEFAULT_MIN_PALLAS_BYTES):
    """out = a * w_min + b * w_max, elementwise, via a lane-dense tiled Pallas kernel."""
    assert a.shape == b.shape, (a.shape, b.shape)
    out_dtype = jnp.promote_types(a.dtype, b.dtype)
    orig_shape = a.shape
    total = math.prod(orig_shape)

    hbm_bytes = total * (jnp.dtype(a.dtype).itemsize
                         + jnp.dtype(b.dtype).itemsize
                         + jnp.dtype(out_dtype).itemsize)
    if total == 0 or total % _LANE != 0 or hbm_bytes < min_bytes:
        # Small or ragged (non-multiple-of-512) sizes: the fused XLA FMA is already at
        # the HBM roofline; a pad/slice pass or kernel launch would only add traffic.
        # TODO(synk): a masked-tail Pallas path for ragged sizes is possible but never
        # pays off for this op.
        return (a.astype(jnp.float32) * w_min
                + b.astype(jnp.float32) * w_max).astype(out_dtype)

    rows = total // _LANE                     # free reshape: no pad, no output slice

    # Sublane alignment for the narrowest operand dtype (8 f32 / 16 bf16 / 32 int8).
    sub = 8
    for dt in (a.dtype, b.dtype, out_dtype):
        sub = max(sub, 32 // jnp.dtype(dt).itemsize)

    target_tile_bytes, vmem_limit = _tile_budget()
    itemsize = max(jnp.dtype(dt).itemsize for dt in (a.dtype, b.dtype, out_dtype))
    tm = max(sub, (target_tile_bytes // (_LANE * itemsize)) // sub * sub)
    tm = min(tm, _round_up(rows, sub))
    nsteps = _cdiv(rows, tm)
    if nsteps < 8 and nsteps % 2 == 1 and rows > sub:
        # Even grid-step count so the "parallel" axis splits evenly over v7x's two
        # TensorCores (no effect on single-TC v5e/v6e).
        tm = max(sub, _round_up(_cdiv(rows, nsteps + 1), sub))
        nsteps = _cdiv(rows, tm)

    a2 = a.reshape(rows, _LANE)
    b2 = b.reshape(rows, _LANE)
    weights = jnp.stack([jnp.asarray(w_min, jnp.float32),
                         jnp.asarray(w_max, jnp.float32)])

    out2 = pl.pallas_call(
        _blend_kernel,
        out_shape=jax.ShapeDtypeStruct((rows, _LANE), out_dtype),
        grid_spec=pltpu.PrefetchScalarGridSpec(
            num_scalar_prefetch=1,            # weights -> SMEM, no per-step recompile
            grid=(nsteps,),
            in_specs=[
                pl.BlockSpec((tm, _LANE), lambda i, w_ref: (i, 0)),
                pl.BlockSpec((tm, _LANE), lambda i, w_ref: (i, 0)),
            ],
            out_specs=pl.BlockSpec((tm, _LANE), lambda i, w_ref: (i, 0)),
        ),
        compiler_params=pltpu.CompilerParams(
            dimension_semantics=("parallel",),
            vmem_limit_bytes=vmem_limit,
        ),
    )(weights, a2, b2)

    return out2.reshape(orig_shape)


# ---------------------------------------------------------------------------
# resize_activations (JAX port of the PyTorch helper; runs in the XLA wrapper)
# ---------------------------------------------------------------------------

def resize_activations(v, so):
    si = list(v.shape)
    so = list(so)
    assert len(si) == len(so) and si[0] == so[0]
    if si[1] > so[1]:
        v = v[:, : so[1]]
    if len(si) == 4 and (si[2] > so[2] or si[3] > so[3]):
        assert si[2] % so[2] == 0 and si[3] % so[3] == 0
        kh, kw = si[2] // so[2], si[3] // so[3]
        n, c = v.shape[0], v.shape[1]
        # avg_pool2d(kernel=stride=(kh,kw), no padding, count_include_pad=False) == block mean
        v = v.reshape(n, c, so[2], kh, so[3], kw).mean(axis=(3, 5))
    if si[2] < so[2]:
        assert so[2] % si[2] == 0 and so[2] / si[2] == so[3] / si[3]
        # TODO(synk): torch F.upsample(mode='bicubic') uses the a=-0.75 cubic kernel;
        # jax.image.resize('cubic') uses the a=-0.5 Keys cubic, so values differ slightly.
        v = jax.image.resize(v, (v.shape[0], v.shape[1], so[2], so[3]), method="cubic")
    if si[1] < so[1]:
        z = jnp.zeros((v.shape[0], so[1] - si[1], so[2], so[3]), dtype=v.dtype)
        v = jnp.concatenate([v, z], axis=1)
    return v


# ---------------------------------------------------------------------------
# GSelectLayer.forward equivalent
# ---------------------------------------------------------------------------

def g_select_forward(x, pre, chain, post, y=None, cur_level=None, insert_y_at=None,
                     use_pallas=True, pallas_min_bytes=_DEFAULT_MIN_PALLAS_BYTES):
    """JAX equivalent of GSelectLayer.forward; the level blend runs in the Pallas kernel."""
    assert len(chain) == len(post)
    num_levels = len(chain)
    if cur_level is None:
        cur_level = num_levels
    if y is not None:
        assert insert_y_at is not None

    min_level = int(math.floor(cur_level - 1))
    max_level = int(math.ceil(cur_level - 1))
    min_level_weight = int(cur_level + 1) - cur_level
    max_level_weight = cur_level - int(cur_level)

    if pre is not None:
        x = pre(x)

    out = {}
    for level in range(0, max_level + 1):
        if level == insert_y_at:
            x = chain[level](x, y)
        else:
            x = chain[level](x)
        if level == min_level:
            out["min_level"] = post[level](x)
        if level == max_level:
            out["max_level"] = post[level](x)
            if use_pallas and min_level == max_level:
                # Integer cur_level: weights are exactly (1, 0) and both operands are the
                # same tensor — skip the blend (and its HBM traffic) entirely.
                x = out["max_level"]
            else:
                min_resized = resize_activations(out["min_level"], out["max_level"].shape)
                if use_pallas:
                    x = blend_pallas(min_resized, out["max_level"],
                                     min_level_weight, max_level_weight,
                                     min_bytes=pallas_min_bytes)
                else:
                    x = (min_resized * min_level_weight
                         + out["max_level"] * max_level_weight)
    return x


if __name__ == "__main__":
    key = jax.random.PRNGKey(0)
    k_x, k_w0, k_w1, k_a, k_b = jax.random.split(key, 5)

    # Small progressive-generator setup consistent with GSelectLayer usage.
    N, C, H, W = 2, 4, 16, 16
    RGB = 3
    x = jax.random.normal(k_x, (N, C, H, W), dtype=jnp.float32)

    def to_rgb(w):
        def f(v):
            return jnp.einsum("nchw,co->nohw", v, w)
        return f

    def nearest_up2(v):
        return jnp.repeat(jnp.repeat(v, 2, axis=2), 2, axis=3)

    # pre/chain/post stand-ins (arbitrary submodules in the original module).
    pre = None
    chain = [
        lambda v: jnp.tanh(v),             # level 0: stays 16x16
        lambda v: 0.5 * nearest_up2(v),    # level 1: 16x16 -> 32x32
    ]
    w0 = 0.1 * jax.random.normal(k_w0, (C, RGB), dtype=jnp.float32)
    w1 = 0.1 * jax.random.normal(k_w1, (C, RGB), dtype=jnp.float32)
    post = [to_rgb(w0), to_rgb(w1)]

    # Fractional level -> exercises resize_activations + the Pallas blend kernel
    # (pallas_min_bytes=0 forces the Pallas path at this small demo size).
    cur_level = 1.5
    out = jax.block_until_ready(
        g_select_forward(x, pre, chain, post, cur_level=cur_level,
                         use_pallas=True, pallas_min_bytes=0))
    ref = g_select_forward(x, pre, chain, post, cur_level=cur_level, use_pallas=False)
    assert out.shape == ref.shape == (N, RGB, 2 * H, 2 * W)
    assert out.dtype == ref.dtype
    assert jnp.allclose(out, ref, atol=1e-5, rtol=1e-5)

    # Default dispatch: this size is below the threshold -> XLA fallback, same semantics.
    out_auto = jax.block_until_ready(
        g_select_forward(x, pre, chain, post, cur_level=cur_level, use_pallas=True))
    assert jnp.allclose(out_auto, ref, atol=1e-5, rtol=1e-5)

    # Integer cur_level path (weights 1 / 0): blend is short-circuited entirely.
    out_int = jax.block_until_ready(
        g_select_forward(x, pre, chain, post, cur_level=2,
                         use_pallas=True, pallas_min_bytes=0))
    ref_int = g_select_forward(x, pre, chain, post, cur_level=2, use_pallas=False)
    assert jnp.allclose(out_int, ref_int, atol=1e-5, rtol=1e-5)

    # Standalone Pallas blend with a multi-step grid (no wrapper pad / no output slice).
    a = jax.random.normal(k_a, (2, 16, 32, 32), dtype=jnp.float32)
    b = jax.random.normal(k_b, (2, 16, 32, 32), dtype=jnp.float32)
    got = jax.block_until_ready(blend_pallas(a, b, 0.25, 0.75, min_bytes=0))
    assert jnp.allclose(got, 0.25 * a + 0.75 * b, atol=1e-5, rtol=1e-5)

    # Ragged size: wrapper falls back to the XLA expression (no pad/slice HBM passes).
    a_r = jax.random.normal(k_a, (5, 3, 17, 19), dtype=jnp.float32)
    b_r = jax.random.normal(k_b, (5, 3, 17, 19), dtype=jnp.float32)
    got_r = jax.block_until_ready(blend_pallas(a_r, b_r, 0.25, 0.75))
    assert jnp.allclose(got_r, 0.25 * a_r + 0.75 * b_r, atol=1e-5, rtol=1e-5)

    print("KERNEL_OK")
</pallas_src>

<mosaic_0001>
module attributes {stable_mosaic.version = 11 : i64} {
  func.func @_blend_kernel(%arg0: i32, %arg1: memref<2xf32, #tpu.memory_space<smem>>, %arg2: memref<8x512xf32, #tpu.memory_space<vmem>>, %arg3: memref<8x512xf32, #tpu.memory_space<vmem>>, %arg4: memref<8x512xf32, #tpu.memory_space<vmem>>) attributes {dimension_semantics = [#tpu.dimension_semantics<parallel>], iteration_bounds = array<i64: 2>, scalar_prefetch = 1 : i64, scratch_operands = 0 : i64, tpu.core_type = #tpu.core_type<tc>, window_params = [{transform_indices = @transform_0, window_bounds = array<i64: 8, 512>}, {transform_indices = @transform_1, window_bounds = array<i64: 8, 512>}, {transform_indices = @transform_2, window_bounds = array<i64: 8, 512>}]} {
    %c0 = arith.constant 0 : index
    %0 = memref.load %arg1[%c0] : memref<2xf32, #tpu.memory_space<smem>>
    %c1 = arith.constant 1 : index
    %1 = memref.load %arg1[%c1] : memref<2xf32, #tpu.memory_space<smem>>
    %c0_0 = arith.constant 0 : index
    %c0_1 = arith.constant 0 : index
    %2 = vector.load %arg2[%c0_0, %c0_1] : memref<8x512xf32, #tpu.memory_space<vmem>>, vector<8x512xf32>
    %c0_2 = arith.constant 0 : index
    %c0_3 = arith.constant 0 : index
    %3 = vector.load %arg3[%c0_2, %c0_3] : memref<8x512xf32, #tpu.memory_space<vmem>>, vector<8x512xf32>
    %4 = vector.broadcast %0 : f32 to vector<8x512xf32>
    %5 = arith.mulf %2, %4 : vector<8x512xf32>
    %6 = vector.broadcast %1 : f32 to vector<8x512xf32>
    %7 = arith.mulf %3, %6 : vector<8x512xf32>
    %8 = arith.addf %5, %7 : vector<8x512xf32>
    %c0_4 = arith.constant 0 : index
    %c0_5 = arith.constant 0 : index
    %9 = vector.load %arg4[%c0_4, %c0_5] : memref<8x512xf32, #tpu.memory_space<vmem>>, vector<8x512xf32>
    tpu.vector_store %arg4[%c0_4, %c0_5], %8 {strides = array<i32>} : memref<8x512xf32, #tpu.memory_space<vmem>>, vector<8x512xf32>,
    return
  }
  func.func @transform_0(%arg0: i32, %arg1: memref<2xf32, #tpu.memory_space<smem>>) -> (i32, i32) {
    %c0_i32 = arith.constant 0 : i32
    %c0_i32_0 = arith.constant 0 : i32
    return %arg0, %c0_i32 : i32, i32
  }
  func.func @transform_1(%arg0: i32, %arg1: memref<2xf32, #tpu.memory_space<smem>>) -> (i32, i32) {
    %c0_i32 = arith.constant 0 : i32
    %c0_i32_0 = arith.constant 0 : i32
    return %arg0, %c0_i32 : i32, i32
  }
  func.func @transform_2(%arg0: i32, %arg1: memref<2xf32, #tpu.memory_space<smem>>) -> (i32, i32) {
    %c0_i32 = arith.constant 0 : i32
    %c0_i32_0 = arith.constant 0 : i32
    return %arg0, %c0_i32 : i32, i32
  }
}

</mosaic_0001>

<llo_original>
// kernel: tpu_custom_call.1
$region0: #{tpu_custom_call.1}
  #allocation0 [shape = 'u32[]', space=smem, size = 0x4, offset = 0x4, fixed_abs, tag = 'smem constant byte address 0x4 - core index']
  #allocation1 [shape = 'u32[72,128]{1,0:T(1,128)}', space=vmem, size = 0x9000, scoped, tag = 'internal scratch']
  #allocation2 [shape = 's32[1]{0}', space=sflag, size = 0x4, scoped, tag = 'scoped memory for tpu_custom_call.1']
  #allocation3 [shape = 'u8[512]{0}', space=smem, size = 0x200, scoped, tag = 'prefetched SMEM operand 0']
  %s0 = inlined_call_operand.hbm [shape: f32[2], index: 0, kind: input, shape index: {}]
  %s1 = inlined_call_operand.hbm [shape: f32[12,512], index: 1, kind: input, shape index: {}]
  %s2 = inlined_call_operand.hbm [shape: f32[12,512], index: 2, kind: input, shape index: {}]
  %s3 = inlined_call_operand.hbm [shape: f32[12,512], index: 3, kind: output, shape index: {}]
  %s4 = sld [smem:[#allocation0]]
  $region49: #{tpu_custom_call.1} parent=0
    _
  %s6 = ssub.s32 1, %s4
  %s7 = scalar_select 0, %s6, %s4
  %s9 = sshll.u32 %s0, 4
  %s10 = int_to_ptr.hbm [resolvable:$true] %s9
  %12 = dma.hbm_to_smem %s10, 16, [#allocation3], [#allocation2]
  %14 = dma.done [#allocation2], 16
  %15 = sfence
  $region1: #{tpu_custom_call.1} parent=0
    #allocation4 [shape = 'u8[32768]{0}', space=vmem, size = 0x8000, scoped, tag = 'input window, operand 1']
    #allocation5 [shape = 's32[2]{0}', space=sflag, size = 0x8, scoped, tag = 'scoped memory for tpu_custom_call.1']
    #allocation6 [shape = 's32[2]{0}', space=sflag, size = 0x8, scoped, tag = 'scoped memory for tpu_custom_call.1']
    #allocation7 [shape = 'u8[32768]{0}', space=vmem, size = 0x8000, scoped, tag = 'input window, operand 2']
    #allocation8 [shape = 's32[2]{0}', space=sflag, size = 0x8, scoped, tag = 'scoped memory for tpu_custom_call.1']
    #allocation9 [shape = 'u8[32768]{0}', space=vmem, size = 0x8000, scoped, tag = 'output window, operand 0']
    %16 = vsyncpa [#allocation5], 0
    %s17 = scalar_lea.sflag [#allocation5], 1
    %18 = vsyncpa %s17, 0
    %19 = vsyncpa [#allocation8], 0
    %s20 = scalar_lea.sflag [#allocation8], 1
    %21 = vsyncpa %s20, 0
    %22 = vsyncpa [#allocation6], 0
    %s23 = scalar_lea.sflag [#allocation6], 1
    %24 = vsyncpa %s23, 0
    loop: start=0, step=1, limit=4
    $region2: #{tpu_custom_call.1} parent=1 // loop_pre_header
      _
    $region3: #{tpu_custom_call.1} parent=1 // loop_header
      %s26 = sphi 0, %s30
      %p27 = scmp.ge.s32.totalorder %s26, 4
      %s36 = sphi 0, %s38
      %s39 = sphi 0, %s36
      %s40 = sphi 0, %s39
      %s56 = sphi 0, %s40
      %s62 = sphi 0, %s64
      %s65 = sphi 0, %s62
      %s66 = sphi 0, %s65
      %s82 = sphi 0, %s66
      %s88 = sphi 0, %s90
      %s91 = sphi 0, %s88
      %s92 = sphi 0, %s91
      %s108 = sphi 0, %s92
    $region4: #{tpu_custom_call.1} parent=1 // loop_header_branch
      %29 = sbr.rel (%p27) target = $region8
    $region5: #{tpu_custom_call.1} parent=1 // loop_body
      %s31 = ssub.s32 %s26, 1
      %s32 = ssub.s32 %s26, 2
      %s33 = sadd.s32 %s26, 1
      %s34 = ssub.s32 %s26, %s33
      %p35 = scmp.eq.s32.totalorder %s34, 0
      %s37 = sadd.s32 %s36, 1
      %s38 = scalar_select %p35, %s36, %s37
      %p41 = pneg %p35
      %p42 = scmp.eq.s32.totalorder %s26, 1
      %p43 = por %p41, %p42
      %p44 = scmp.ne.s32.totalorder %s36, %s39
      %p45 = scmp.eq.s32.totalorder %s26, 0
      %p46 = por %p44, %p45
      %p47 = scmp.ne.s32.totalorder %s36, %s39
      %p48 = scmp.eq.s32.totalorder %s31, 1
      %p49 = por %p47, %p48
      %p50 = scmp.ne.s32.totalorder %s39, %s40
      %p51 = scmp.eq.s32.totalorder %s31, 0
      %p52 = por %p50, %p51
      %p53 = scmp.ne.s32.totalorder %s39, %s40
      %p54 = scmp.eq.s32.totalorder %s32, 1
      %p55 = por %p53, %p54
      %p57 = scmp.ne.s32.totalorder %s40, %s56
      %p58 = scmp.eq.s32.totalorder %s32, 0
      %p59 = por %p57, %p58
      %s60 = ssub.s32 %s26, %s33
      %p61 = scmp.eq.s32.totalorder %s60, 0
      %s63 = sadd.s32 %s62, 1
      %s64 = scalar_select %p61, %s62, %s63
      %p67 = pneg %p61
      %p68 = scmp.eq.s32.totalorder %s26, 1
      %p69 = por %p67, %p68
      %p70 = scmp.ne.s32.totalorder %s62, %s65
      %p71 = scmp.eq.s32.totalorder %s26, 0
      %p72 = por %p70, %p71
      %p73 = scmp.ne.s32.totalorder %s62, %s65
      %p74 = scmp.eq.s32.totalorder %s31, 1
      %p75 = por %p73, %p74
      %p76 = scmp.ne.s32.totalorder %s65, %s66
      %p77 = scmp.eq.s32.totalorder %s31, 0
      %p78 = por %p76, %p77
      %p79 = scmp.ne.s32.totalorder %s65, %s66
      %p80 = scmp.eq.s32.totalorder %s32, 1
      %p81 = por %p79, %p80
      %p83 = scmp.ne.s32.totalorder %s66, %s82
      %p84 = scmp.eq.s32.totalorder %s32, 0
      %p85 = por %p83, %p84
      %s86 = ssub.s32 %s26, %s33
      %p87 = scmp.eq.s32.totalorder %s86, 0
      %s89 = sadd.s32 %s88, 1
      %s90 = scalar_select %p87, %s88, %s89
      %p93 = pneg %p87
      %p94 = scmp.eq.s32.totalorder %s26, 1
      %p95 = por %p93, %p94
      %p96 = scmp.ne.s32.totalorder %s88, %s91
      %p97 = scmp.eq.s32.totalorder %s26, 0
      %p98 = por %p96, %p97
      %p99 = scmp.ne.s32.totalorder %s88, %s91
      %p100 = scmp.eq.s32.totalorder %s31, 1
      %p101 = por %p99, %p100
      %p102 = scmp.ne.s32.totalorder %s91, %s92
      %p103 = scmp.eq.s32.totalorder %s31, 0
      %p104 = por %p102, %p103
      %p105 = scmp.ne.s32.totalorder %s91, %s92
      %p106 = scmp.eq.s32.totalorder %s32, 1
      %p107 = por %p105, %p106
      %p109 = scmp.ne.s32.totalorder %s92, %s108
      %p110 = scmp.eq.s32.totalorder %s32, 0
      %p111 = por %p109, %p110
      %p112 = scmp.le.s32.totalorder 1, %s26
      %p113 = scmp.lt.s32.totalorder %s26, 3
      %p114 = pnand %p112, %p113
      %p115 = pneg %p114
      // Predicated region
      $region9: #{tpu_custom_call.1} parent=5 // pred_check
        _
      $region10: #{tpu_custom_call.1} parent=5 // pred_check_branch
        %117 = sbr.rel (%p114) target = $region12
      $region11: #{tpu_custom_call.1} parent=5 // pred_region
        %s118 = ssub.s32 %s26, 1
      $region12: #{tpu_custom_call.1} parent=5 // pred_fallthru
        _
      %p119 = scmp.lt.s32.totalorder %s26, 2
      // Predicated region
      $region13: #{tpu_custom_call.1} parent=5 // pred_check
        %p120 = pneg %p119
      $region14: #{tpu_custom_call.1} parent=5 // pred_check_branch
        %122 = sbr.rel (%p120) target = $region16
      $region15: #{tpu_custom_call.1} parent=5 // pred_region
        // Predicated region
        $region17: #{tpu_custom_call.1} parent=15 // pred_check
          %p123 = pneg %p46
        $region18: #{tpu_custom_call.1} parent=15 // pred_check_branch
          %125 = sbr.rel (%p123) target = $region20
        $region19: #{tpu_custom_call.1} parent=15 // pred_region
          %s126 = sand.u32 %s36, 1
          %s127 = scalar_lea.sflag [#allocation5], %s126
          %s128 = sand.u32 %s36, 1
          %s129 = smul.addr %s128, 32
          %s130 = scalar_lea.vmem [#allocation4], %s129
          %132 = vsyncadd %s127, 0
          %s133 = smul.addr %s26, 4
          %s134 = smul.addr %s133, 8
          %s135 = scalar_lea.hbm %s1, %s134
          %s137 = sshll.u32 %s135, 4
          %s138 = int_to_ptr.hbm [resolvable:$true] %s137
          %s139 = sshll.u32 %s130, 4
          %s140 = int_to_ptr.vmem [resolvable:$true] %s139
          %142 = dma.hbm_to_vmem [thread:$0]  %s138, 512, %s140, %s127
        $region20: #{tpu_custom_call.1} parent=15 // pred_fallthru
          _
        // Predicated region
        $region21: #{tpu_custom_call.1} parent=15 // pred_check
          %p143 = pneg %p72
        $region22: #{tpu_custom_call.1} parent=15 // pred_check_branch
          %145 = sbr.rel (%p143) target = $region24
        $region23: #{tpu_custom_call.1} parent=15 // pred_region
          %s146 = sand.u32 %s62, 1
          %s147 = scalar_lea.sflag [#allocation8], %s146
          %s148 = sand.u32 %s62, 1
          %s149 = smul.addr %s148, 32
          %s150 = scalar_lea.vmem [#allocation7], %s149
          %152 = vsyncadd %s147, 0
          %s153 = smul.addr %s26, 4
          %s154 = smul.addr %s153, 8
          %s155 = scalar_lea.hbm %s2, %s154
          %s157 = sshll.u32 %s155, 4
          %s158 = int_to_ptr.hbm [resolvable:$true] %s157
          %s159 = sshll.u32 %s150, 4
          %s160 = int_to_ptr.vmem [resolvable:$true] %s159
          %162 = dma.hbm_to_vmem [thread:$0]  %s158, 512, %s160, %s147
        $region24: #{tpu_custom_call.1} parent=15 // pred_fallthru
          _
      $region16: #{tpu_custom_call.1} parent=5 // pred_fallthru
        _
      %p163 = scmp.le.s32.totalorder 1, %s26
      %p164 = scmp.lt.s32.totalorder %s26, 3
      %p165 = pnand %p163, %p164
      %p166 = pneg %p165
      // Predicated region
      $region25: #{tpu_custom_call.1} parent=5 // pred_check
        _
      $region26: #{tpu_custom_call.1} parent=5 // pred_check_branch
        %168 = sbr.rel (%p165) target = $region28
      $region27: #{tpu_custom_call.1} parent=5 // pred_region
        %s169 = ssub.s32 %s26, 1
        %s170 = sand.u32 %s39, 1
        %s171 = scalar_lea.sflag [#allocation5], %s170
        %s172 = sand.u32 %s39, 1
        %s173 = smul.addr %s172, 32
        %s174 = scalar_lea.vmem [#allocation4], %s173
        // Predicated region
        $region29: #{tpu_custom_call.1} parent=27 // pred_check
          %p175 = pneg %p52
        $region30: #{tpu_custom_call.1} parent=27 // pred_check_branch
          %177 = sbr.rel (%p175) target = $region32
        $region31: #{tpu_custom_call.1} parent=27 // pred_region
          %179 = dma.done %s171, 512
        $region32: #{tpu_custom_call.1} parent=27 // pred_fallthru
          _
        %s180 = sand.u32 %s65, 1
        %s181 = scalar_lea.sflag [#allocation8], %s180
        %s182 = sand.u32 %s65, 1
        %s183 = smul.addr %s182, 32
        %s184 = scalar_lea.vmem [#allocation7], %s183
        // Predicated region
        $region33: #{tpu_custom_call.1} parent=27 // pred_check
          %p185 = pneg %p78
        $region34: #{tpu_custom_call.1} parent=27 // pred_check_branch
          %187 = sbr.rel (%p185) target = $region36
        $region35: #{tpu_custom_call.1} parent=27 // pred_region
          %189 = dma.done %s181, 512
        $region36: #{tpu_custom_call.1} parent=27 // pred_fallthru
          _
        %s190 = sand.u32 %s39, 1
        %s191 = scalar_lea.sflag [#allocation5], %s190
        %s192 = sand.u32 %s39, 1
        %s193 = smul.addr %s192, 32
        %s194 = scalar_lea.vmem [#allocation4], %s193
        %p195 = pneg %p52
        %p196 = pneg %p49
        %s197 = sand.u32 %s65, 1
        %s198 = scalar_lea.sflag [#allocation8], %s197
        %s199 = sand.u32 %s65, 1
        %s200 = smul.addr %s199, 32
        %s201 = scalar_lea.vmem [#allocation7], %s200
        %p202 = pneg %p78
        %p203 = pneg %p75
        %p204 = pneg %p104
        %p205 = pneg %p101
        %s206 = sand.u32 %s91, 1
        %s207 = scalar_lea.sflag [#allocation6], %s206
        %s208 = sand.u32 %s91, 1
        %s209 = smul.addr %s208, 32
        %s210 = scalar_lea.vmem [#allocation9], %s209
        %s211 = sld [smem:[#allocation3]]
        %s212 = sld [smem:[#allocation3 + $0x1]]
        %v213 = vld [vmem:[%s174] sm:$0xff]
        %v214 = vld [vmem:[%s174 + $0x8] sm:$0xff]
        %v215 = vld [vmem:[%s174 + $0x10] sm:$0xff]
        %v216 = vld [vmem:[%s174 + $0x18] sm:$0xff]
        %v217 = vld [vmem:[%s184] sm:$0xff]
        %v218 = vld [vmem:[%s184 + $0x8] sm:$0xff]
        %v219 = vld [vmem:[%s184 + $0x10] sm:$0xff]
        %v220 = vld [vmem:[%s184 + $0x18] sm:$0xff]
        %v221 = vstv %s211
        %v222 = vmul.f32 %v213, %v221
        %v223 = vmul.f32 %v214, %v221
        %v224 = vmul.f32 %v215, %v221
        %v225 = vmul.f32 %v216, %v221
        %v226 = vstv %s212
        %v227 = vmul.f32 %v217, %v226
        %v228 = vmul.f32 %v218, %v226
        %v229 = vmul.f32 %v219, %v226
        %v230 = vmul.f32 %v220, %v226
        %v231 = vadd.f32 %v222, %v227
        %v232 = vadd.f32 %v223, %v228
        %v233 = vadd.f32 %v224, %v229
        %v234 = vadd.f32 %v225, %v230
        %235 = vst [vmem:[%s210] sm:$0xff] %v231
        %236 = vst [vmem:[%s210 + $0x8] sm:$0xff] %v232
        %237 = vst [vmem:[%s210 + $0x10] sm:$0xff] %v233
        %238 = vst [vmem:[%s210 + $0x18] sm:$0xff] %v234
        %s239 = sand.u32 %s91, 1
        %s240 = scalar_lea.sflag [#allocation6], %s239
        %s241 = sand.u32 %s91, 1
        %s242 = smul.addr %s241, 32
        %s243 = scalar_lea.vmem [#allocation9], %s242
        // Predicated region
        $region37: #{tpu_custom_call.1} parent=27 // pred_check
          %p244 = pneg %p101
        $region38: #{tpu_custom_call.1} parent=27 // pred_check_branch
          %246 = sbr.rel (%p244) target = $region40
        $region39: #{tpu_custom_call.1} parent=27 // pred_region
          %248 = vsyncadd %s240, 0
          %s249 = smul.addr %s31, 4
          %s250 = smul.addr %s249, 8
          %s251 = scalar_lea.hbm %s3, %s250
          %s253 = sshll.u32 %s243, 4
          %s254 = int_to_ptr.vmem [resolvable:$true] %s253
          %s255 = sshll.u32 %s251, 4
          %s256 = int_to_ptr.hbm [resolvable:$true] %s255
          %258 = dma.vmem_to_hbm [thread:$0]  %s254, 512, %s256, %s240
        $region40: #{tpu_custom_call.1} parent=27 // pred_fallthru
          _
      $region28: #{tpu_custom_call.1} parent=5 // pred_fallthru
        _
      %p259 = scmp.le.s32.totalorder 2, %s26
      // Predicated region
      $region41: #{tpu_custom_call.1} parent=5 // pred_check
        %p260 = pneg %p259
      $region42: #{tpu_custom_call.1} parent=5 // pred_check_branch
        %262 = sbr.rel (%p260) target = $region44
      $region43: #{tpu_custom_call.1} parent=5 // pred_region
        %s263 = ssub.s32 %s26, 2
        // Predicated region
        $region45: #{tpu_custom_call.1} parent=43 // pred_check
          %p264 = pneg %p107
        $region46: #{tpu_custom_call.1} parent=43 // pred_check_branch
          %266 = sbr.rel (%p264) target = $region48
        $region47: #{tpu_custom_call.1} parent=43 // pred_region
          %s267 = sand.u32 %s92, 1
          %s268 = scalar_lea.sflag [#allocation6], %s267
          %s269 = sand.u32 %s92, 1
          %s270 = smul.addr %s269, 32
          %s271 = scalar_lea.vmem [#allocation9], %s270
          %273 = dma.done %s268, 512
        $region48: #{tpu_custom_call.1} parent=43 // pred_fallthru
          _
      $region44: #{tpu_custom_call.1} parent=5 // pred_fallthru
        _
    $region6: #{tpu_custom_call.1} parent=1 // loop_footer
      %s30 = sadd.s32 1, %s26
    $region7: #{tpu_custom_call.1} parent=1 // loop_footer_branch
      %25 = sbr.rel target = $region3
    $region8: #{tpu_custom_call.1} parent=1 // loop_exit
      _
    %274 = vsyncpa [#allocation5], 1
    %s275 = scalar_lea.sflag [#allocation5], 1
    %276 = vsyncpa %s275, 1
    %277 = vsyncpa [#allocation8], 1
    %s278 = scalar_lea.sflag [#allocation8], 1
    %279 = vsyncpa %s278, 1
    %280 = vsyncpa [#allocation6], 1
    %s281 = scalar_lea.sflag [#allocation6], 1
    %282 = vsyncpa %s281, 1

</llo_original>
